<compile_context>
chip_gen: v7x
topology: tpu7x:2x2x1
jax: 0.10.0
libtpu: 0.0.40
codegen_flags: <defaults>
</compile_context>

<pallas_src>
import numpy as np
import jax
import jax.numpy as jnp
from jax.experimental import pallas as pl
from jax.experimental.pallas import tpu as pltpu


# ----------------------------- Pallas kernel -----------------------------

def _decoder_fused_kernel(x_ref, tokp_ref, wrx_ref, wpo_ref, sel_ref, csel_ref,
                          uh_ref, uwt_ref, bias_ref, o_ref, acc_ref):
    """One (batch, level) grid step.

    Every level:   h = gelu(x @ Wrx[lvl] + tokproj)        (tokproj precomputed in wrapper)
                   d = sum_c h * (wp[lvl] @ wo)            (folded head, lane reduction)
                   acc(ph,pw) += sel @ (csel * d)          (flat tokens -> lane-dense grid)
    Last level:    bilinear upsample (align_corners=True) as two lane-dense bf16 matmuls
                   + ReLU, written to the lane-padded (H, Wpad) output slab.
    """
    lvl = pl.program_id(1)

    @pl.when(lvl == 0)
    def _():
        # Fold the total folded-head bias (SMEM scalar) into the accumulator init.
        acc_ref[...] = jnp.zeros_like(acc_ref) + bias_ref[0]

    # readout: concat([x, cls_tok]) @ Wr + br == x @ Wrx + (tok @ Wrt + br)
    # (the token part is precomputed per (level, batch) -> no (C,C) Wrt DMA per step)
    x = x_ref[0, 0]                                             # (N, C) bf16 patch tokens
    w = wrx_ref[lvl]                                            # (C, C) bf16, hoisted block
    h = jnp.dot(x, w, preferred_element_type=jnp.float32)       # (N, C) f32
    h = jax.nn.gelu(h + tokp_ref[0, 0], approximate=True)       # f32 epilogue (v5e-safe VPU)

    # folded 1x1 head (wp @ wo): per-token scalar via lane reduction (no N_out=1 matmul)
    d = jnp.sum(h * wpo_ref[lvl], axis=-1, keepdims=True)       # (N, 1) f32

    # lane-dense scatter of the flat token scalars into the (ph, pw) patch grid:
    #   acc[r, c] += d[r*pw + c]   (sel[r,n] = [n//pw == r],  csel[n,c] = [n%pw == c])
    acc_ref[...] += jnp.dot(sel_ref[...], csel_ref[...] * d,
                            preferred_element_type=jnp.float32)  # (ph, pw)

    # last level: bilinear upsample (align_corners=True) + ReLU for this batch
    @pl.when(lvl == pl.num_programs(1) - 1)
    def _():
        dpatch = acc_ref[...].astype(jnp.bfloat16)                              # (ph, pw)
        # W direction first, then H: both outputs are lane-dense (Wpad % 128 == 0).
        t = jnp.dot(dpatch, uwt_ref[...], preferred_element_type=jnp.float32)   # (ph, Wpad)
        o = jnp.dot(uh_ref[...], t.astype(jnp.bfloat16),
                    preferred_element_type=jnp.float32)                         # (H, Wpad)
        o_ref[0] = jnp.maximum(o, 0.0).astype(o_ref.dtype)                      # F.relu


# ----------------------------- host-side helpers -----------------------------

def _interp_matrix(out_size, in_size):
    """Row-interpolation matrix matching F.interpolate(mode='bilinear', align_corners=True)."""
    if in_size == 1:
        return np.ones((out_size, 1), np.float32)
    if out_size == 1:
        src = np.zeros((1,), np.float64)
    else:
        src = np.arange(out_size, dtype=np.float64) * (in_size - 1) / (out_size - 1)
    i0 = np.clip(np.floor(src).astype(np.int64), 0, in_size - 1)
    i1 = np.clip(i0 + 1, 0, in_size - 1)
    w1 = (src - i0).astype(np.float32)
    w0 = 1.0 - w1
    m = np.zeros((out_size, in_size), np.float32)
    m[np.arange(out_size), i0] += w0
    m[np.arange(out_size), i1] += w1
    return m


def _vmem_limit_bytes():
    """Generation-aware scoped-VMEM limit: ~3/4 of physical VMEM, capped at 100 MiB
    (-> ~48 MiB on v7x's 64 MiB, ~96 MiB on v5e/v6e's 128 MiB)."""
    try:
        cap = pltpu.get_tpu_info().vmem_capacity_bytes
        return int(min(cap * 3 // 4, 100 * 1024 * 1024))
    except Exception:
        return 48 * 1024 * 1024   # safe on every generation


# ----------------------------- Decoder -----------------------------

class PallasDecoder:
    def __init__(self, h, w, dims, joints, use_clstoken, params):
        assert use_clstoken, "only the use_clstoken=True path exists (PyTorch asserts otherwise)"
        self.h, self.w = h, w
        self.dims, self.joints = dims, joints

        L = len(joints) // 2
        B, N, C = dims[1]                      # all levels share (B, N, C) in this placeholder
        ph, pw = h // 14, w // 14
        assert N == ph * pw, "patch tokens must cover the (h//14, w//14) grid"
        self.L, self.B, self.N, self.C = L, B, N, C
        self.ph, self.pw = ph, pw
        self.w_pad = -(-w // 128) * 128        # lane-dense output slab width
        self.vmem_limit = _vmem_limit_bytes()

        # ---- split & fold level weights once (wrapper side) ----
        # split Linear(2C->C): concat([x, tok]) @ wr == x @ wr[:C] + tok @ wr[C:]
        self.wrx = jnp.stack([params["wr"][i][:C] for i in range(L)]).astype(jnp.bfloat16)  # (L,C,C)
        self.wrt = jnp.stack([params["wr"][i][C:] for i in range(L)]).astype(jnp.float32)   # (L,C,C) wrapper-only
        self.br = jnp.stack([params["br"][i] for i in range(L)]).astype(jnp.float32)        # (L,1,C)
        # fold the linear 1x1 head into each level projection: (wp_i @ wo) as a row vector
        self.wpo = jnp.stack([(params["wp"][i] @ params["wo"]).T
                              for i in range(L)]).astype(jnp.float32)                       # (L,1,C)
        bias = sum(params["bp"][i] @ params["wo"] for i in range(L)) + params["bo"]         # (1,1)
        self.bias_tot = jnp.asarray(bias, jnp.float32).reshape(1)                           # (1,) -> SMEM

        # ---- bilinear(align_corners=True) as two lane-dense bf16 matmuls ----
        self.uh = jnp.asarray(_interp_matrix(h, ph), jnp.bfloat16)            # (H, ph)
        uwt = np.zeros((pw, self.w_pad), np.float32)
        uwt[:, :w] = _interp_matrix(w, pw).T                                   # zero-padded lanes
        self.uwt = jnp.asarray(uwt, jnp.bfloat16)                              # (pw, Wpad)

        # ---- flat-token -> (ph, pw) patch-grid scatter as tiny selector matrices ----
        n_idx = np.arange(N)
        sel = np.zeros((ph, N), np.float32);  sel[n_idx // pw, n_idx] = 1.0
        csel = np.zeros((N, pw), np.float32); csel[n_idx, n_idx % pw] = 1.0
        self.sel, self.csel = jnp.asarray(sel), jnp.asarray(csel)

    def _run_fused(self, x_all, tokproj_all):
        L, B, N, C = self.L, self.B, self.N, self.C
        H, ph, pw, Wp = self.h, self.ph, self.pw, self.w_pad
        # TODO(synk): at production sizes on v7x (64 MiB VMEM) single-buffer the hoisted
        # (L,C,C) weight block / constants (pipeline_mode=pl.Buffered(1)) or fall back to
        # per-level weight streaming, and add a second parallel axis over H when B == 1;
        # sweep pl.Buffered(3) on the streamed x block if the profile shows exposed DMA.
        return pl.pallas_call(
            _decoder_fused_kernel,
            out_shape=jax.ShapeDtypeStruct((B, H, Wp), jnp.float32),
            grid=(B, L),
            in_specs=[
                pl.BlockSpec((1, 1, N, C), lambda b, l: (l, b, 0, 0)),   # x        (L,B,N,C) bf16 (streamed)
                pl.BlockSpec((1, 1, 1, C), lambda b, l: (l, b, 0, 0)),   # tokproj  (L,B,1,C) f32  (tiny, streamed)
                pl.BlockSpec((L, C, C),    lambda b, l: (0, 0, 0)),      # Wrx      hoisted, DMA'd once
                pl.BlockSpec((L, 1, C),    lambda b, l: (0, 0, 0)),      # wp@wo    hoisted
                pl.BlockSpec((ph, N),      lambda b, l: (0, 0)),         # sel      constant
                pl.BlockSpec((N, pw),      lambda b, l: (0, 0)),         # csel     constant
                pl.BlockSpec((H, ph),      lambda b, l: (0, 0)),         # UH       constant bf16
                pl.BlockSpec((pw, Wp),     lambda b, l: (0, 0)),         # UW^T     constant bf16, lane-padded
                pl.BlockSpec(memory_space=pltpu.MemorySpace.SMEM),       # bias_tot (1,) f32 scalar in SMEM
            ],
            out_specs=pl.BlockSpec((1, H, Wp), lambda b, l: (b, 0, 0)),  # resident across levels
            scratch_shapes=[pltpu.VMEM((ph, pw), jnp.float32)],          # lane-dense cross-level acc
            compiler_params=pltpu.CompilerParams(
                dimension_semantics=("parallel", "arbitrary"),           # batch shards across TCs
                vmem_limit_bytes=self.vmem_limit,                        # generation-aware cap
            ),
        )(x_all, tokproj_all, self.wrx, self.wpo, self.sel, self.csel,
          self.uh, self.uwt, self.bias_tot)

    def __call__(self, features):
        # torch.split(features, joints) + torch.reshape(..., dims[i])  -- pure glue (XLA)
        view, off = [], 0
        for j in self.joints:
            view.append(jax.lax.slice_in_dim(features, off, off + j, axis=0))
            off += j
        xs, toks = [], []
        for i in range(0, len(self.joints), 2):
            toks.append(view[i].reshape(self.dims[i])[:, None, :])     # (B, 1, C) cls token
            xs.append(view[i + 1].reshape(self.dims[i + 1]))           # (B, N, C) patch tokens
        x_all = jnp.stack(xs, axis=0).astype(jnp.bfloat16)             # (L, B, N, C)
        tok_all = jnp.stack(toks, axis=0).astype(jnp.float32)          # (L, B, 1, C)

        # Precompute the cls-token readout contribution once (tiny batched matmul):
        #   tokproj[l, b] = tok[l, b] @ Wrt[l] + br[l]      -> kernel never streams Wrt.
        tokproj = (jnp.einsum('lbxc,lcd->lbxd', tok_all, self.wrt)
                   + self.br[:, None, :, :]).astype(jnp.float32)       # (L, B, 1, C)

        out = self._run_fused(x_all, tokproj)                          # (B, H, Wpad)
        # slice off the lane padding and present NCHW like the PyTorch module
        return out[:, :, : self.w].reshape(self.B, 1, self.h, self.w)


# ----------------------------- main -----------------------------

if __name__ == "__main__":
    B, C, FEAT, H, W = 2, 32, 32, 56, 56       # h, w multiples of 14
    ph, pw = H // 14, W // 14
    N = ph * pw
    n_levels = 2

    dims, joints = [], []
    for _ in range(n_levels):
        dims.append((B, C));        joints.append(B * C)          # cls token
        dims.append((B, N, C));     joints.append(B * N * C)      # patch tokens

    key = jax.random.PRNGKey(0)
    keys = jax.random.split(key, 4 * n_levels + 3)
    params = {"wr": [], "br": [], "wp": [], "bp": []}
    k = 0
    for _ in range(n_levels):
        params["wr"].append(0.05 * jax.random.normal(keys[k], (2 * C, C), jnp.float32)); k += 1
        params["br"].append(0.05 * jax.random.normal(keys[k], (1, C), jnp.float32));     k += 1
        params["wp"].append(0.05 * jax.random.normal(keys[k], (C, FEAT), jnp.float32));  k += 1
        params["bp"].append(0.05 * jax.random.normal(keys[k], (1, FEAT), jnp.float32));  k += 1
    params["wo"] = 0.05 * jax.random.normal(keys[k], (FEAT, 1), jnp.float32); k += 1
    params["bo"] = 0.05 * jax.random.normal(keys[k], (1, 1), jnp.float32);    k += 1

    features = jax.random.normal(keys[k], (sum(joints),), jnp.float32)

    decoder = PallasDecoder(H, W, dims, joints, use_clstoken=True, params=params)
    depth = jax.block_until_ready(decoder(features))

    assert depth.shape == (B, 1, H, W), depth.shape
    assert bool(jnp.all(depth >= 0.0))          # ReLU output is non-negative
    assert bool(jnp.all(jnp.isfinite(depth)))
    print("KERNEL_OK")
</pallas_src>

<mosaic_0001>
module attributes {stable_mosaic.version = 11 : i64} {
  func.func @_decoder_fused_kernel(%arg0: i32, %arg1: i32, %arg2: memref<1x1x16x32xbf16, #tpu.memory_space<vmem>>, %arg3: memref<1x1x1x32xf32, #tpu.memory_space<vmem>>, %arg4: memref<2x32x32xbf16, #tpu.memory_space<vmem>>, %arg5: memref<2x1x32xf32, #tpu.memory_space<vmem>>, %arg6: memref<4x16xf32, #tpu.memory_space<vmem>>, %arg7: memref<16x4xf32, #tpu.memory_space<vmem>>, %arg8: memref<56x4xbf16, #tpu.memory_space<vmem>>, %arg9: memref<4x128xbf16, #tpu.memory_space<vmem>>, %arg10: memref<1xf32, #tpu.memory_space<smem>>, %arg11: memref<1x56x128xf32, #tpu.memory_space<vmem>>, %arg12: memref<4x4xf32, #tpu.memory_space<vmem>>) attributes {dimension_semantics = [#tpu.dimension_semantics<parallel>, #tpu.dimension_semantics<arbitrary>], iteration_bounds = array<i64: 2, 2>, scalar_prefetch = 0 : i64, scratch_operands = 1 : i64, tpu.core_type = #tpu.core_type<tc>, window_params = [{transform_indices = @transform_0, window_bounds = array<i64: 1, 1, 16, 32>}, {transform_indices = @transform_1, window_bounds = array<i64: 1, 1, 1, 32>}, {pipeline_mode = #tpu.pipeline_mode<synchronous>, transform_indices = @transform_2, window_bounds = array<i64: 2, 32, 32>}, {pipeline_mode = #tpu.pipeline_mode<synchronous>, transform_indices = @transform_3, window_bounds = array<i64: 2, 1, 32>}, {pipeline_mode = #tpu.pipeline_mode<synchronous>, transform_indices = @transform_4, window_bounds = array<i64: 4, 16>}, {pipeline_mode = #tpu.pipeline_mode<synchronous>, transform_indices = @transform_5, window_bounds = array<i64: 16, 4>}, {pipeline_mode = #tpu.pipeline_mode<synchronous>, transform_indices = @transform_6, window_bounds = array<i64: 56, 4>}, {pipeline_mode = #tpu.pipeline_mode<synchronous>, transform_indices = @transform_7, window_bounds = array<i64: 4, 128>}, {transform_indices = @transform_8, window_bounds = array<i64: 1>}, {transform_indices = @transform_9, window_bounds = array<i64: 1, 56, 128>}]} {
    %c0_i32 = arith.constant 0 : i32
    %0 = arith.cmpi eq, %arg1, %c0_i32 : i32
    %1 = arith.extui %0 : i1 to i32
    %c0_i32_0 = arith.constant 0 : i32
    %2 = arith.cmpi ne, %1, %c0_i32_0 : i32
    scf.if %2 {
      %cst_27 = arith.constant 0.000000e+00 : f32
      %44 = vector.broadcast %cst_27 : f32 to vector<4x4xf32>
      %c0_28 = arith.constant 0 : index
      %45 = memref.load %arg10[%c0_28] : memref<1xf32, #tpu.memory_space<smem>>
      %46 = vector.broadcast %45 : f32 to vector<4x4xf32>
      %47 = arith.addf %44, %46 : vector<4x4xf32>
      %c0_29 = arith.constant 0 : index
      %c0_30 = arith.constant 0 : index
      %48 = vector.load %arg12[%c0_29, %c0_30] : memref<4x4xf32, #tpu.memory_space<vmem>>, vector<4x4xf32>
      tpu.vector_store %arg12[%c0_29, %c0_30], %47 {strides = array<i32>} : memref<4x4xf32, #tpu.memory_space<vmem>>, vector<4x4xf32>,
    } else {
    }
    %c0 = arith.constant 0 : index
    %c0_1 = arith.constant 0 : index
    %c0_2 = arith.constant 0 : index
    %c0_3 = arith.constant 0 : index
    %3 = vector.load %arg2[%c0, %c0_1, %c0_2, %c0_3] : memref<1x1x16x32xbf16, #tpu.memory_space<vmem>>, vector<1x1x16x32xbf16>
    %4 = vector.shape_cast %3 : vector<1x1x16x32xbf16> to vector<16x32xbf16>
    %5 = arith.index_cast %arg1 : i32 to index
    %c0_4 = arith.constant 0 : index
    %c0_5 = arith.constant 0 : index
    %6 = vector.load %arg4[%5, %c0_4, %c0_5] : memref<2x32x32xbf16, #tpu.memory_space<vmem>>, vector<1x32x32xbf16>
    %7 = vector.shape_cast %6 : vector<1x32x32xbf16> to vector<32x32xbf16>
    %cst = arith.constant dense<0.000000e+00> : vector<16x32xf32>
    %8 = tpu.matmul %4, %7, %cst {dimension_numbers = #tpu.dot_dimension_numbers<[1], [0], [0], [1], [0, 0, 1, 1], [], []>} : vector<16x32xbf16>, vector<32x32xbf16>, vector<16x32xf32> -> vector<16x32xf32>
    %c0_6 = arith.constant 0 : index
    %c0_7 = arith.constant 0 : index
    %c0_8 = arith.constant 0 : index
    %c0_9 = arith.constant 0 : index
    %9 = vector.load %arg3[%c0_6, %c0_7, %c0_8, %c0_9] : memref<1x1x1x32xf32, #tpu.memory_space<vmem>>, vector<1x1x1x32xf32>
    %10 = vector.shape_cast %9 : vector<1x1x1x32xf32> to vector<1x32xf32>
    %11 = vector.broadcast %10 : vector<1x32xf32> to vector<16x32xf32>
    %12 = arith.addf %8, %11 : vector<16x32xf32>
    %13 = arith.mulf %12, %12 : vector<16x32xf32>
    %14 = arith.mulf %12, %13 : vector<16x32xf32>
    %cst_10 = arith.constant 4.471500e-02 : f32
    %15 = vector.broadcast %cst_10 : f32 to vector<16x32xf32>
    %16 = arith.mulf %15, %14 : vector<16x32xf32>
    %17 = arith.addf %12, %16 : vector<16x32xf32>
    %cst_11 = arith.constant 0.797884583 : f32
    %18 = vector.broadcast %cst_11 : f32 to vector<16x32xf32>
    %19 = arith.mulf %18, %17 : vector<16x32xf32>
    %20 = math.tanh %19 : vector<16x32xf32>
    %cst_12 = arith.constant 1.000000e+00 : f32
    %21 = vector.broadcast %cst_12 : f32 to vector<16x32xf32>
    %22 = arith.addf %21, %20 : vector<16x32xf32>
    %cst_13 = arith.constant 5.000000e-01 : f32
    %23 = vector.broadcast %cst_13 : f32 to vector<16x32xf32>
    %24 = arith.mulf %23, %22 : vector<16x32xf32>
    %25 = arith.mulf %12, %24 : vector<16x32xf32>
    %26 = arith.index_cast %arg1 : i32 to index
    %c0_14 = arith.constant 0 : index
    %c0_15 = arith.constant 0 : index
    %27 = vector.load %arg5[%26, %c0_14, %c0_15] : memref<2x1x32xf32, #tpu.memory_space<vmem>>, vector<1x1x32xf32>
    %28 = vector.shape_cast %27 : vector<1x1x32xf32> to vector<1x32xf32>
    %29 = vector.broadcast %28 : vector<1x32xf32> to vector<16x32xf32>
    %30 = arith.mulf %25, %29 : vector<16x32xf32>
    %cst_16 = arith.constant dense<0.000000e+00> : vector<16xf32>
    %31 = vector.multi_reduction <add>, %30, %cst_16 [1] : vector<16x32xf32> to vector<16xf32>
    %32 = vector.shape_cast %31 : vector<16xf32> to vector<16x1xf32>
    %c0_17 = arith.constant 0 : index
    %c0_18 = arith.constant 0 : index
    %33 = vector.load %arg12[%c0_17, %c0_18] : memref<4x4xf32, #tpu.memory_space<vmem>>, vector<4x4xf32>
    %c0_19 = arith.constant 0 : index
    %c0_20 = arith.constant 0 : index
    %34 = vector.load %arg6[%c0_19, %c0_20] : memref<4x16xf32, #tpu.memory_space<vmem>>, vector<4x16xf32>
    %c0_21 = arith.constant 0 : index
    %c0_22 = arith.constant 0 : index
    %35 = vector.load %arg7[%c0_21, %c0_22] : memref<16x4xf32, #tpu.memory_space<vmem>>, vector<16x4xf32>
    %36 = vector.broadcast %32 : vector<16x1xf32> to vector<16x4xf32>
    %37 = arith.mulf %35, %36 : vector<16x4xf32>
    %cst_23 = arith.constant dense<0.000000e+00> : vector<4x4xf32>
    %38 = tpu.matmul %34, %37, %cst_23 {dimension_numbers = #tpu.dot_dimension_numbers<[1], [0], [0], [1], [0, 0, 1, 1], [], []>} : vector<4x16xf32>, vector<16x4xf32>, vector<4x4xf32> -> vector<4x4xf32>
    %39 = arith.addf %33, %38 : vector<4x4xf32>
    %c0_24 = arith.constant 0 : index
    %c0_25 = arith.constant 0 : index
    %40 = vector.load %arg12[%c0_24, %c0_25] : memref<4x4xf32, #tpu.memory_space<vmem>>, vector<4x4xf32>
    tpu.vector_store %arg12[%c0_24, %c0_25], %39 {strides = array<i32>} : memref<4x4xf32, #tpu.memory_space<vmem>>, vector<4x4xf32>,
    %c1_i32 = arith.constant 1 : i32
    %41 = arith.cmpi eq, %arg1, %c1_i32 : i32
    %42 = arith.extui %41 : i1 to i32
    %c0_i32_26 = arith.constant 0 : i32
    %43 = arith.cmpi ne, %42, %c0_i32_26 : i32
    scf.if %43 {
      %c0_27 = arith.constant 0 : index
      %c0_28 = arith.constant 0 : index
      %44 = vector.load %arg12[%c0_27, %c0_28] : memref<4x4xf32, #tpu.memory_space<vmem>>, vector<4x4xf32>
      %45 = arith.truncf %44 : vector<4x4xf32> to vector<4x4xbf16>
      %c0_29 = arith.constant 0 : index
      %c0_30 = arith.constant 0 : index
      %46 = vector.load %arg9[%c0_29, %c0_30] : memref<4x128xbf16, #tpu.memory_space<vmem>>, vector<4x128xbf16>
      %cst_31 = arith.constant dense<0.000000e+00> : vector<4x128xf32>
      %47 = tpu.matmul %45, %46, %cst_31 {dimension_numbers = #tpu.dot_dimension_numbers<[1], [0], [0], [1], [0, 0, 1, 1], [], []>} : vector<4x4xbf16>, vector<4x128xbf16>, vector<4x128xf32> -> vector<4x128xf32>
      %c0_32 = arith.constant 0 : index
      %c0_33 = arith.constant 0 : index
      %48 = vector.load %arg8[%c0_32, %c0_33] : memref<56x4xbf16, #tpu.memory_space<vmem>>, vector<56x4xbf16>
      %49 = arith.truncf %47 : vector<4x128xf32> to vector<4x128xbf16>
      %cst_34 = arith.constant dense<0.000000e+00> : vector<56x128xf32>
      %50 = tpu.matmul %48, %49, %cst_34 {dimension_numbers = #tpu.dot_dimension_numbers<[1], [0], [0], [1], [0, 0, 1, 1], [], []>} : vector<56x4xbf16>, vector<4x128xbf16>, vector<56x128xf32> -> vector<56x128xf32>
      %cst_35 = arith.constant 0.000000e+00 : f32
      %51 = vector.broadcast %cst_35 : f32 to vector<56x128xf32>
      %52 = arith.maximumf %50, %51 : vector<56x128xf32>
      %c0_36 = arith.constant 0 : index
      %c0_37 = arith.constant 0 : index
      %c0_38 = arith.constant 0 : index
      %53 = vector.load %arg11[%c0_36, %c0_37, %c0_38] : memref<1x56x128xf32, #tpu.memory_space<vmem>>, vector<1x56x128xf32>
      %54 = vector.shape_cast %53 : vector<1x56x128xf32> to vector<56x128xf32>
      %55 = vector.shape_cast %52 : vector<56x128xf32> to vector<1x56x128xf32>
      tpu.vector_store %arg11[%c0_36, %c0_37, %c0_38], %55 {strides = array<i32>} : memref<1x56x128xf32, #tpu.memory_space<vmem>>, vector<1x56x128xf32>,
    } else {
    }
    return
  }
  func.func @transform_0(%arg0: i32, %arg1: i32) -> (i32, i32, i32, i32) {
    %c0_i32 = arith.constant 0 : i32
    %c0_i32_0 = arith.constant 0 : i32
    %c0_i32_1 = arith.constant 0 : i32
    return %arg1, %arg0, %c0_i32, %c0_i32_0 : i32, i32, i32, i32
  }
  func.func @transform_1(%arg0: i32, %arg1: i32) -> (i32, i32, i32, i32) {
    %c0_i32 = arith.constant 0 : i32
    %c0_i32_0 = arith.constant 0 : i32
    %c0_i32_1 = arith.constant 0 : i32
    return %arg1, %arg0, %c0_i32, %c0_i32_0 : i32, i32, i32, i32
  }
  func.func @transform_2(%arg0: i32, %arg1: i32) -> (i32, i32, i32) {
    %c0_i32 = arith.constant 0 : i32
    %c0_i32_0 = arith.constant 0 : i32
    %c0_i32_1 = arith.constant 0 : i32
    %c0_i32_2 = arith.constant 0 : i32
    return %c0_i32, %c0_i32_0, %c0_i32_1 : i32, i32, i32
  }
  func.func @transform_3(%arg0: i32, %arg1: i32) -> (i32, i32, i32) {
    %c0_i32 = arith.constant 0 : i32
    %c0_i32_0 = arith.constant 0 : i32
    %c0_i32_1 = arith.constant 0 : i32
    %c0_i32_2 = arith.constant 0 : i32
    return %c0_i32, %c0_i32_0, %c0_i32_1 : i32, i32, i32
  }
  func.func @transform_4(%arg0: i32, %arg1: i32) -> (i32, i32) {
    %c0_i32 = arith.constant 0 : i32
    %c0_i32_0 = arith.constant 0 : i32
    %c0_i32_1 = arith.constant 0 : i32
    return %c0_i32, %c0_i32_0 : i32, i32
  }
  func.func @transform_5(%arg0: i32, %arg1: i32) -> (i32, i32) {
    %c0_i32 = arith.constant 0 : i32
    %c0_i32_0 = arith.constant 0 : i32
    %c0_i32_1 = arith.constant 0 : i32
    return %c0_i32, %c0_i32_0 : i32, i32
  }
  func.func @transform_6(%arg0: i32, %arg1: i32) -> (i32, i32) {
    %c0_i32 = arith.constant 0 : i32
    %c0_i32_0 = arith.constant 0 : i32
    %c0_i32_1 = arith.constant 0 : i32
    return %c0_i32, %c0_i32_0 : i32, i32
  }
  func.func @transform_7(%arg0: i32, %arg1: i32) -> (i32, i32) {
    %c0_i32 = arith.constant 0 : i32
    %c0_i32_0 = arith.constant 0 : i32
    %c0_i32_1 = arith.constant 0 : i32
    return %c0_i32, %c0_i32_0 : i32, i32
  }
  func.func @transform_8(%arg0: i32, %arg1: i32) -> i32 {
    %c0_i32 = arith.constant 0 : i32
    %c0_i32_0 = arith.constant 0 : i32
    return %c0_i32 : i32
  }
  func.func @transform_9(%arg0: i32, %arg1: i32) -> (i32, i32, i32) {
    %c0_i32 = arith.constant 0 : i32
    %c0_i32_0 = arith.constant 0 : i32
    %c0_i32_1 = arith.constant 0 : i32
    return %arg0, %c0_i32, %c0_i32_0 : i32, i32, i32
  }
}

</mosaic_0001>

<llo_original>
// kernel: tpu_custom_call.1
$region0: #{tpu_custom_call.1}
  #allocation0 [shape = 'u32[]', space=smem, size = 0x4, offset = 0x4, fixed_abs, tag = 'smem constant byte address 0x4 - core index']
  #allocation1 [shape = 'u32[144,128]{1,0:T(1,128)}', space=vmem, size = 0x12000, scoped, tag = 'internal scratch']
  #allocation2 [shape = 'f32[4,4]{1,0:T(4,128)}', space=vmem, size = 0x800, scoped, tag = 'scratch operand']
  #allocation3 [shape = 'f32[1]{0:T(128)S(6)}', space=smem, size = 0x200, scoped, tag = 'scoped memory for tpu_custom_call.1']
  %s0 = inlined_call_operand.vmem [shape: bf16[2,2,16,32], index: 0, kind: input, shape index: {}]
  %s1 = inlined_call_operand.vmem [shape: f32[2,2,1,32], index: 1, kind: input, shape index: {}]
  %s2 = inlined_call_operand.hbm [shape: bf16[2,32,32], index: 2, kind: input, shape index: {}]
  %s3 = inlined_call_operand.vmem [shape: f32[2,1,32], index: 3, kind: input, shape index: {}]
  %s4 = inlined_call_operand.vmem [shape: f32[4,16], index: 4, kind: input, shape index: {}]
  %s5 = inlined_call_operand.vmem [shape: f32[16,4], index: 5, kind: input, shape index: {}]
  %s6 = inlined_call_operand.vmem [shape: bf16[56,4], index: 6, kind: input, shape index: {}]
  %s7 = inlined_call_operand.vmem [shape: bf16[4,128], index: 7, kind: input, shape index: {}]
  %s8 = inlined_call_operand.<no memory space> [shape: f32[1], index: 8, kind: input, shape index: {}]
  %s9 = inlined_call_operand.hbm [shape: f32[2,56,128], index: 9, kind: output, shape index: {}]
  %s10 = sld [smem:[#allocation0]]
  $region81: #{tpu_custom_call.1} parent=0
    _
  %s12 = ssub.s32 1, %s10
  %s13 = scalar_select 0, %s12, %s10
  %14 = sst [smem:[#allocation3]] %s8
  $region1: #{tpu_custom_call.1} parent=0
    #allocation4 [shape = 'u8[16384]{0}', space=vmem, size = 0x4000, scoped, tag = 'input window, operand 2, single buffered']
    #allocation5 [shape = 's32[2]{0}', space=sflag, size = 0x8, scoped, tag = 'scoped memory for tpu_custom_call.1']
    #allocation6 [shape = 's32[2]{0}', space=sflag, size = 0x8, scoped, tag = 'scoped memory for tpu_custom_call.1']
    #allocation7 [shape = 'u8[57344]{0}', space=vmem, size = 0xe000, scoped, tag = 'output window, operand 0']
    %15 = vsyncpa [#allocation5], 0
    %16 = vsyncpa [#allocation6], 0
    %s17 = scalar_lea.sflag [#allocation6], 1
    %18 = vsyncpa %s17, 0
    loop: start=0, step=1, limit=6
    $region2: #{tpu_custom_call.1} parent=1 // loop_pre_header
      _
    $region3: #{tpu_custom_call.1} parent=1 // loop_header
      %s20 = sphi 0, %s24
      %p21 = scmp.ge.s32.totalorder %s20, 6
      %s27 = sphi 0, %s39
      %s28 = sphi 0, %s35
      %s29 = sphi 0, %s27
      %s30 = sphi 0, %s28
      %s31 = sphi 0, %s29
      %s32 = sphi 0, %s30
      %s44 = sphi 0, %s46
      %s47 = sphi 0, %s44
      %s48 = sphi 0, %s47
      %s64 = sphi 0, %s48
      %s72 = sphi 0, %s74
      %s75 = sphi 0, %s72
      %s76 = sphi 0, %s75
      %s92 = sphi 0, %s76
      %s96 = sphi 0, %s96
      %s98 = sphi 0, %s96
      %s99 = sphi 0, %s98
      %s113 = sphi 0, %s99
      %s117 = sphi 0, %s117
      %s119 = sphi 0, %s117
      %s120 = sphi 0, %s119
      %s134 = sphi 0, %s120
      %s138 = sphi 0, %s138
      %s140 = sphi 0, %s138
      %s141 = sphi 0, %s140
      %s155 = sphi 0, %s141
      %s159 = sphi 0, %s159
      %s161 = sphi 0, %s159
      %s162 = sphi 0, %s161
      %s176 = sphi 0, %s162
      %s180 = sphi 0, %s180
      %s182 = sphi 0, %s180
      %s183 = sphi 0, %s182
      %s197 = sphi 0, %s183
      %s201 = sphi 0, %s201
      %s203 = sphi 0, %s201
      %s204 = sphi 0, %s203
      %s218 = sphi 0, %s204
      %s222 = sphi 0, %s222
      %s224 = sphi 0, %s222
      %s225 = sphi 0, %s224
      %s239 = sphi 0, %s225
      %s245 = sphi 0, %s247
      %s248 = sphi 0, %s245
      %s249 = sphi 0, %s248
      %s265 = sphi 0, %s249
    $region4: #{tpu_custom_call.1} parent=1 // loop_header_branch
      %23 = sbr.rel (%p21) target = $region8
    $region5: #{tpu_custom_call.1} parent=1 // loop_body
      %s25 = ssub.s32 %s20, 1
      %s26 = ssub.s32 %s20, 2
      %s33 = sadd.s32 1, %s28
      %p34 = scmp.ge.s32.totalorder %s33, 2
      %s35 = scalar_select %p34, 0, %s33
      %s36 = sadd.s32 1, %s27
      %s37 = scalar_select %p34, %s36, %s27
      %p38 = scmp.ge.s32.totalorder %s37, 2
      %s39 = scalar_select %p38, 0, %s37
      %s40 = ssub.s32 %s28, %s35
      %s41 = ssub.s32 %s27, %s39
      %s42 = sor.u32 %s40, %s41
      %p43 = scmp.eq.s32.totalorder %s42, 0
      %s45 = sadd.s32 %s44, 1
      %s46 = scalar_select %p43, %s44, %s45
      %p49 = pneg %p43
      %p50 = scmp.eq.s32.totalorder %s20, 3
      %p51 = por %p49, %p50
      %p52 = scmp.ne.s32.totalorder %s44, %s47
      %p53 = scmp.eq.s32.totalorder %s20, 0
      %p54 = por %p52, %p53
      %p55 = scmp.ne.s32.totalorder %s44, %s47
      %p56 = scmp.eq.s32.totalorder %s25, 3
      %p57 = por %p55, %p56
      %p58 = scmp.ne.s32.totalorder %s47, %s48
      %p59 = scmp.eq.s32.totalorder %s25, 0
      %p60 = por %p58, %p59
      %p61 = scmp.ne.s32.totalorder %s47, %s48
      %p62 = scmp.eq.s32.totalorder %s26, 3
      %p63 = por %p61, %p62
      %p65 = scmp.ne.s32.totalorder %s48, %s64
      %p66 = scmp.eq.s32.totalorder %s26, 0
      %p67 = por %p65, %p66
      %s68 = ssub.s32 %s28, %s35
      %s69 = ssub.s32 %s27, %s39
      %s70 = sor.u32 %s68, %s69
      %p71 = scmp.eq.s32.totalorder %s70, 0
      %s73 = sadd.s32 %s72, 1
      %s74 = scalar_select %p71, %s72, %s73
      %p77 = pneg %p71
      %p78 = scmp.eq.s32.totalorder %s20, 3
      %p79 = por %p77, %p78
      %p80 = scmp.ne.s32.totalorder %s72, %s75
      %p81 = scmp.eq.s32.totalorder %s20, 0
      %p82 = por %p80, %p81
      %p83 = scmp.ne.s32.totalorder %s72, %s75
      %p84 = scmp.eq.s32.totalorder %s25, 3
      %p85 = por %p83, %p84
      %p86 = scmp.ne.s32.totalorder %s75, %s76
      %p87 = scmp.eq.s32.totalorder %s25, 0
      %p88 = por %p86, %p87
      %p89 = scmp.ne.s32.totalorder %s75, %s76
      %p90 = scmp.eq.s32.totalorder %s26, 3
      %p91 = por %p89, %p90
      %p93 = scmp.ne.s32.totalorder %s76, %s92
      %p94 = scmp.eq.s32.totalorder %s26, 0
      %p95 = por %p93, %p94
      %s97 = sadd.s32 %s96, 1
      %p100 = scmp.eq.s32.totalorder %s20, 3
      %p101 = scmp.ne.s32.totalorder %s96, %s98
      %p102 = scmp.eq.s32.totalorder %s20, 0
      %p103 = por %p101, %p102
      %p104 = scmp.ne.s32.totalorder %s96, %s98
      %p105 = scmp.eq.s32.totalorder %s25, 3
      %p106 = por %p104, %p105
      %p107 = scmp.ne.s32.totalorder %s98, %s99
      %p108 = scmp.eq.s32.totalorder %s25, 0
      %p109 = por %p107, %p108
      %p110 = scmp.ne.s32.totalorder %s98, %s99
      %p111 = scmp.eq.s32.totalorder %s26, 3
      %p112 = por %p110, %p111
      %p114 = scmp.ne.s32.totalorder %s99, %s113
      %p115 = scmp.eq.s32.totalorder %s26, 0
      %p116 = por %p114, %p115
      %s118 = sadd.s32 %s117, 1
      %p121 = scmp.eq.s32.totalorder %s20, 3
      %p122 = scmp.ne.s32.totalorder %s117, %s119
      %p123 = scmp.eq.s32.totalorder %s20, 0
      %p124 = por %p122, %p123
      %p125 = scmp.ne.s32.totalorder %s117, %s119
      %p126 = scmp.eq.s32.totalorder %s25, 3
      %p127 = por %p125, %p126
      %p128 = scmp.ne.s32.totalorder %s119, %s120
      %p129 = scmp.eq.s32.totalorder %s25, 0
      %p130 = por %p128, %p129
      %p131 = scmp.ne.s32.totalorder %s119, %s120
      %p132 = scmp.eq.s32.totalorder %s26, 3
      %p133 = por %p131, %p132
      %p135 = scmp.ne.s32.totalorder %s120, %s134
      %p136 = scmp.eq.s32.totalorder %s26, 0
      %p137 = por %p135, %p136
      %s139 = sadd.s32 %s138, 1
      %p142 = scmp.eq.s32.totalorder %s20, 3
      %p143 = scmp.ne.s32.totalorder %s138, %s140
      %p144 = scmp.eq.s32.totalorder %s20, 0
      %p145 = por %p143, %p144
      %p146 = scmp.ne.s32.totalorder %s138, %s140
      %p147 = scmp.eq.s32.totalorder %s25, 3
      %p148 = por %p146, %p147
      %p149 = scmp.ne.s32.totalorder %s140, %s141
      %p150 = scmp.eq.s32.totalorder %s25, 0
      %p151 = por %p149, %p150
      %p152 = scmp.ne.s32.totalorder %s140, %s141
      %p153 = scmp.eq.s32.totalorder %s26, 3
      %p154 = por %p152, %p153
      %p156 = scmp.ne.s32.totalorder %s141, %s155
      %p157 = scmp.eq.s32.totalorder %s26, 0
      %p158 = por %p156, %p157
      %s160 = sadd.s32 %s159, 1
      %p163 = scmp.eq.s32.totalorder %s20, 3
      %p164 = scmp.ne.s32.totalorder %s159, %s161
      %p165 = scmp.eq.s32.totalorder %s20, 0
      %p166 = por %p164, %p165
      %p167 = scmp.ne.s32.totalorder %s159, %s161
      %p168 = scmp.eq.s32.totalorder %s25, 3
      %p169 = por %p167, %p168
      %p170 = scmp.ne.s32.totalorder %s161, %s162
      %p171 = scmp.eq.s32.totalorder %s25, 0
      %p172 = por %p170, %p171
      %p173 = scmp.ne.s32.totalorder %s161, %s162
      %p174 = scmp.eq.s32.totalorder %s26, 3
      %p175 = por %p173, %p174
      %p177 = scmp.ne.s32.totalorder %s162, %s176
      %p178 = scmp.eq.s32.totalorder %s26, 0
      %p179 = por %p177, %p178
      %s181 = sadd.s32 %s180, 1
      %p184 = scmp.eq.s32.totalorder %s20, 3
      %p185 = scmp.ne.s32.totalorder %s180, %s182
      %p186 = scmp.eq.s32.totalorder %s20, 0
      %p187 = por %p185, %p186
      %p188 = scmp.ne.s32.totalorder %s180, %s182
      %p189 = scmp.eq.s32.totalorder %s25, 3
      %p190 = por %p188, %p189
      %p191 = scmp.ne.s32.totalorder %s182, %s183
      %p192 = scmp.eq.s32.totalorder %s25, 0
      %p193 = por %p191, %p192
      %p194 = scmp.ne.s32.totalorder %s182, %s183
      %p195 = scmp.eq.s32.totalorder %s26, 3
      %p196 = por %p194, %p195
      %p198 = scmp.ne.s32.totalorder %s183, %s197
      %p199 = scmp.eq.s32.totalorder %s26, 0
      %p200 = por %p198, %p199
      %s202 = sadd.s32 %s201, 1
      %p205 = scmp.eq.s32.totalorder %s20, 3
      %p206 = scmp.ne.s32.totalorder %s201, %s203
      %p207 = scmp.eq.s32.totalorder %s20, 0
      %p208 = por %p206, %p207
      %p209 = scmp.ne.s32.totalorder %s201, %s203
      %p210 = scmp.eq.s32.totalorder %s25, 3
      %p211 = por %p209, %p210
      %p212 = scmp.ne.s32.totalorder %s203, %s204
      %p213 = scmp.eq.s32.totalorder %s25, 0
      %p214 = por %p212, %p213
      %p215 = scmp.ne.s32.totalorder %s203, %s204
      %p216 = scmp.eq.s32.totalorder %s26, 3
      %p217 = por %p215, %p216
      %p219 = scmp.ne.s32.totalorder %s204, %s218
      %p220 = scmp.eq.s32.totalorder %s26, 0
      %p221 = por %p219, %p220
      %s223 = sadd.s32 %s222, 1
      %p226 = scmp.eq.s32.totalorder %s20, 3
      %p227 = scmp.ne.s32.totalorder %s222, %s224
      %p228 = scmp.eq.s32.totalorder %s20, 0
      %p229 = por %p227, %p228
      %p230 = scmp.ne.s32.totalorder %s222, %s224
      %p231 = scmp.eq.s32.totalorder %s25, 3
      %p232 = por %p230, %p231
      %p233 = scmp.ne.s32.totalorder %s224, %s225
      %p234 = scmp.eq.s32.totalorder %s25, 0
      %p235 = por %p233, %p234
      %p236 = scmp.ne.s32.totalorder %s224, %s225
      %p237 = scmp.eq.s32.totalorder %s26, 3
      %p238 = por %p236, %p237
      %p240 = scmp.ne.s32.totalorder %s225, %s239
      %p241 = scmp.eq.s32.totalorder %s26, 0
      %p242 = por %p240, %p241
      %s243 = ssub.s32 %s27, %s39
      %p244 = scmp.eq.s32.totalorder %s243, 0
      %s246 = sadd.s32 %s245, 1
      %s247 = scalar_select %p244, %s245, %s246
      %p250 = pneg %p244
      %p251 = scmp.eq.s32.totalorder %s20, 3
      %p252 = por %p250, %p251
      %p253 = scmp.ne.s32.totalorder %s245, %s248
      %p254 = scmp.eq.s32.totalorder %s20, 0
      %p255 = por %p253, %p254
      %p256 = scmp.ne.s32.totalorder %s245, %s248
      %p257 = scmp.eq.s32.totalorder %s25, 3
      %p258 = por %p256, %p257
      %p259 = scmp.ne.s32.totalorder %s248, %s249
      %p260 = scmp.eq.s32.totalorder %s25, 0
      %p261 = por %p259, %p260
      %p262 = scmp.ne.s32.totalorder %s248, %s249
      %p263 = scmp.eq.s32.totalorder %s26, 3
      %p264 = por %p262, %p263
      %p266 = scmp.ne.s32.totalorder %s249, %s265
      %p267 = scmp.eq.s32.totalorder %s26, 0
      %p268 = por %p266, %p267
      %p269 = scmp.le.s32.totalorder 1, %s20
      %p270 = scmp.lt.s32.totalorder %s20, 5
      %p271 = pnand %p269, %p270
      %p272 = pneg %p271
      // Predicated region
      $region9: #{tpu_custom_call.1} parent=5 // pred_check
        _
      $region10: #{tpu_custom_call.1} parent=5 // pred_check_branch
        %274 = sbr.rel (%p271) target = $region12
      $region11: #{tpu_custom_call.1} parent=5 // pred_region
        %s275 = ssub.s32 %s20, 1
        // Predicated region
        $region13: #{tpu_custom_call.1} parent=11 // pred_check
          %p276 = pneg %p109
        $region14: #{tpu_custom_call.1} parent=11 // pred_check_branch
          %278 = sbr.rel (%p276) target = $region16
        $region15: #{tpu_custom_call.1} parent=11 // pred_region
          %s280 = ssub.s32 512, 512
          %281 = vsyncadd [#allocation5], %s280
          %s282 = sshll.u32 [#allocation4], 4
          %s283 = int_to_ptr.vmem [resolvable:$true] %s282
          %288 = dma.hbm_to_vmem [thread:$0]  %s2, 512, %s283, [#allocation5], 64, 64, 4
        $region16: #{tpu_custom_call.1} parent=11 // pred_fallthru
          _
        // Predicated region
        $region17: #{tpu_custom_call.1} parent=11 // pred_check
          %p289 = pneg %p130
        $region18: #{tpu_custom_call.1} parent=11 // pred_check_branch
          %291 = sbr.rel (%p289) target = $region20
        $region19: #{tpu_custom_call.1} parent=11 // pred_region
          _
        $region20: #{tpu_custom_call.1} parent=11 // pred_fallthru
          _
        // Predicated region
        $region21: #{tpu_custom_call.1} parent=11 // pred_check
          %p292 = pneg %p151
        $region22: #{tpu_custom_call.1} parent=11 // pred_check_branch
          %294 = sbr.rel (%p292) target = $region24
        $region23: #{tpu_custom_call.1} parent=11 // pred_region
          _
        $region24: #{tpu_custom_call.1} parent=11 // pred_fallthru
          _
        // Predicated region
        $region25: #{tpu_custom_call.1} parent=11 // pred_check
          %p295 = pneg %p172
        $region26: #{tpu_custom_call.1} parent=11 // pred_check_branch
          %297 = sbr.rel (%p295) target = $region28
        $region27: #{tpu_custom_call.1} parent=11 // pred_region
          _
        $region28: #{tpu_custom_call.1} parent=11 // pred_fallthru
          _
        // Predicated region
        $region29: #{tpu_custom_call.1} parent=11 // pred_check
          %p298 = pneg %p193
        $region30: #{tpu_custom_call.1} parent=11 // pred_check_branch
          %300 = sbr.rel (%p298) target = $region32
        $region31: #{tpu_custom_call.1} parent=11 // pred_region
          _
        $region32: #{tpu_custom_call.1} parent=11 // pred_fallthru
          _
        // Predicated region
        $region33: #{tpu_custom_call.1} parent=11 // pred_check
          %p301 = pneg %p214
        $region34: #{tpu_custom_call.1} parent=11 // pred_check_branch
          %303 = sbr.rel (%p301) target = $region36
        $region35: #{tpu_custom_call.1} parent=11 // pred_region
          _
        $region36: #{tpu_custom_call.1} parent=11 // pred_fallthru
          _
        // Predicated region
        $region37: #{tpu_custom_call.1} parent=11 // pred_check
          %p304 = pneg %p235
        $region38: #{tpu_custom_call.1} parent=11 // pred_check_branch
          %306 = sbr.rel (%p304) target = $region40
        $region39: #{tpu_custom_call.1} parent=11 // pred_region
          _
        $region40: #{tpu_custom_call.1} parent=11 // pred_fallthru
          _
      $region12: #{tpu_custom_call.1} parent=5 // pred_fallthru
        _
      %p307 = scmp.lt.s32.totalorder %s20, 4
      // Predicated region
      $region41: #{tpu_custom_call.1} parent=5 // pred_check
        %p308 = pneg %p307
      $region42: #{tpu_custom_call.1} parent=5 // pred_check_branch
        %310 = sbr.rel (%p308) target = $region44
      $region43: #{tpu_custom_call.1} parent=5 // pred_region
        // Predicated region
        $region45: #{tpu_custom_call.1} parent=43 // pred_check
          %p311 = pneg %p54
        $region46: #{tpu_custom_call.1} parent=43 // pred_check_branch
          %313 = sbr.rel (%p311) target = $region48
        $region47: #{tpu_custom_call.1} parent=43 // pred_region
          %p314 = scmp.lt.s32.totalorder %s28, 1
          %s315 = scalar_select %p314, %s28, 1
          %p316 = scmp.lt.s32.totalorder %s27, 1
          %s317 = scalar_select %p316, %s27, 1
          %s318 = smul.addr %s317, 2
          %s319 = smul.addr %s315, 4
          %s320 = sadd.s32 %s318, %s319
          %s321 = smul.addr %s320, 4
          %s322 = scalar_lea.vmem %s0, %s321
        $region48: #{tpu_custom_call.1} parent=43 // pred_fallthru
          _
        // Predicated region
        $region49: #{tpu_custom_call.1} parent=43 // pred_check
          %p323 = pneg %p82
        $region50: #{tpu_custom_call.1} parent=43 // pred_check_branch
          %325 = sbr.rel (%p323) target = $region52
        $region51: #{tpu_custom_call.1} parent=43 // pred_region
          %p326 = scmp.lt.s32.totalorder %s28, 1
          %s327 = scalar_select %p326, %s28, 1
          %p328 = scmp.lt.s32.totalorder %s27, 1
          %s329 = scalar_select %p328, %s27, 1
          %s330 = smul.addr %s327, 2
          %s331 = sadd.s32 %s329, %s330
          %s332 = scalar_lea.vmem %s1, %s331
        $region52: #{tpu_custom_call.1} parent=43 // pred_fallthru
          _
      $region44: #{tpu_custom_call.1} parent=5 // pred_fallthru
        _
      %p333 = scmp.le.s32.totalorder 1, %s20
      %p334 = scmp.lt.s32.totalorder %s20, 5
      %p335 = pnand %p333, %p334
      %p336 = pneg %p335
      // Predicated region
      $region53: #{tpu_custom_call.1} parent=5 // pred_check
        _
      $region54: #{tpu_custom_call.1} parent=5 // pred_check_branch
        %338 = sbr.rel (%p335) target = $region56
      $region55: #{tpu_custom_call.1} parent=5 // pred_region
        %s339 = ssub.s32 %s20, 1
        // Predicated region
        $region57: #{tpu_custom_call.1} parent=55 // pred_check
          %p340 = pneg %p109
        $region58: #{tpu_custom_call.1} parent=55 // pred_check_branch
          %342 = sbr.rel (%p340) target = $region60
        $region59: #{tpu_custom_call.1} parent=55 // pred_region
          %343 = dma.done [#allocation5], 512
        $region60: #{tpu_custom_call.1} parent=55 // pred_fallthru
          _
        %p344 = scmp.lt.s32.totalorder %s30, 1
        %s345 = scalar_select %p344, %s30, 1
        %p346 = scmp.lt.s32.totalorder %s29, 1
        %s347 = scalar_select %p346, %s29, 1
        %s348 = smul.addr %s347, 2
        %s349 = smul.addr %s345, 4
        %s350 = sadd.s32 %s348, %s349
        %s351 = smul.addr %s350, 4
        %s352 = scalar_lea.vmem %s0, %s351
        %p353 = pneg %p60
        %p354 = pneg %p57
        %p355 = scmp.lt.s32.totalorder %s30, 1
        %s356 = scalar_select %p355, %s30, 1
        %p357 = scmp.lt.s32.totalorder %s29, 1
        %s358 = scalar_select %p357, %s29, 1
        %s359 = smul.addr %s356, 2
        %s360 = sadd.s32 %s358, %s359
        %s361 = scalar_lea.vmem %s1, %s360
        %p362 = pneg %p88
        %p363 = pneg %p85
        %p364 = pneg %p109
        %p365 = pneg %p106
        %p366 = pneg %p130
        %p367 = pneg %p127
        %p368 = pneg %p151
        %p369 = pneg %p148
        %p370 = pneg %p172
        %p371 = pneg %p169
        %p372 = pneg %p193
        %p373 = pneg %p190
        %p374 = pneg %p214
        %p375 = pneg %p211
        %p376 = pneg %p235
        %p377 = pneg %p232
        %p378 = pneg %p261
        %p379 = pneg %p258
        %s380 = sand.u32 %s248, 1
        %s381 = scalar_lea.sflag [#allocation6], %s380
        %s382 = sand.u32 %s248, 1
        %s383 = smul.addr %s382, 56
        %s384 = scalar_lea.vmem [#allocation7], %s383
        %p385 = scmp.lt.s32.totalorder %s30, 1
        %s386 = scalar_select %p385, %s30, 1
        %p387 = scmp.lt.s32.totalorder %s29, 1
        %s388 = scalar_select %p387, %s29, 1
        %s389 = smul.addr %s388, 2
        %s390 = smul.addr %s386, 4
        %s391 = sadd.s32 %s389, %s390
        %s392 = smul.addr %s391, 4
        %s393 = scalar_lea.vmem %s0, %s392
        %p394 = scmp.lt.s32.totalorder %s30, 1
        %s395 = scalar_select %p394, %s30, 1
        %p396 = scmp.lt.s32.totalorder %s29, 1
        %s397 = scalar_select %p396, %s29, 1
        %s398 = smul.addr %s395, 2
        %s399 = sadd.s32 %s397, %s398
        %s400 = scalar_lea.vmem %s1, %s399
        %p402 = scmp.eq.s32.totalorder %s30, 0
        // Predicated region
        $region61: #{tpu_custom_call.1} parent=55 // pred_check
          %p403 = pneg %p402
        $region62: #{tpu_custom_call.1} parent=55 // pred_check_branch
          %405 = sbr.rel (%p403) target = $region64
        $region63: #{tpu_custom_call.1} parent=55 // pred_region
          %s406 = sld [smem:[#allocation3]]
          %v407 = vstv %s406
          %v408 = vadd.f32 %v407, 0.0
          %vm409 = vcmask 27648
          %410 = vst.msk [vmem:[#allocation2] sm:$0xf] %vm409, %v408
        $region64: #{tpu_custom_call.1} parent=55 // pred_fallthru
          _
        %v411 = vld [vmem:[%s393] sm:$0xf]
        %v412 = vld [vmem:[%s393 + $0x4] sm:$0xf]
        %s413 = smul.u32 %s30, 4
        %s414 = smul.addr %s413, 4
        %s415 = scalar_lea.vmem [#allocation4], %s414
        %v416 = vld [vmem:[%s415] sm:$0xf]
        %v417 = vld [vmem:[%s415 + $0x4] sm:$0xf]
        %v418 = vld [vmem:[%s415 + $0x8] sm:$0xf]
        %v419 = vld [vmem:[%s415 + $0xc] sm:$0xf]
        %v420 = vld [vmem:[%s400] sm:$0x1]
        %v422 = vlaneseq
        %v423 = vshrl.u32 %v422, 7
        %v424 = vsub.s32 0, %v423
        %v425 = vrot.slane %v420, %v424
        %v429 = vunpack.c.l.b16 %v411
        %v430 = vunpack.c.l.b16 %v412
        %v431 = vpack.c.b16 %v430, %v429
        %v436 = vunpack.c.l.b16 %v416
        %v437 = vunpack.c.l.b16 %v417
        %v438 = vunpack.c.l.b16 %v418
        %v439 = vunpack.c.l.b16 %v419
        %v440 = vpack.c.b16 %v437, %v436
        %v441 = vpack.c.b16 %v439, %v438
        %vm444 = vcmask 261120
        %v446 = vsel %vm444, %v431, 0
        %448 = vmatprep.subr.bf16.mxu0 0
        %449 = vmatpush1.bf16.msra.mxu0 %v440
        %450 = vmatprep.subr.bf16.mxu0 0
        %451 = vmatpush1.bf16.msra.mxu0 %v441
        %452 = vmatprep.subr.bf16.mxu0 0
        %453 = vmatpush1.bf16.msra.mxu0 0
        %454 = vmatprep.subr.bf16.mxu0 0
        %455 = vmatpush1.bf16.msra.mxu0 0
        %456 = vmatprep.subr.bf16.mxu0 0
        %457 = vmatpush1.bf16.msra.mxu0 0
        %458 = vmatprep.subr.bf16.mxu0 0
        %459 = vmatpush1.bf16.msra.mxu0 0
        %460 = vmatprep.subr.bf16.mxu0 0
        %461 = vmatpush1.bf16.msra.mxu0 0
        %462 = vmatprep.subr.bf16.mxu0 0
        %463 = vmatpush1.bf16.msra.mxu0 0
        %464 = vmatprep.subr.bf16.mxu0 0
        %465 = vmatpush1.bf16.msra.mxu0 0
        %466 = vmatprep.subr.bf16.mxu0 0
        %467 = vmatpush1.bf16.msra.mxu0 0
        %468 = vmatprep.subr.bf16.mxu0 0
        %469 = vmatpush1.bf16.msra.mxu0 0
        %470 = vmatprep.subr.bf16.mxu0 0
        %471 = vmatpush1.bf16.msra.mxu0 0
        %472 = vmatprep.subr.bf16.mxu0 0
        %473 = vmatpush1.bf16.msra.mxu0 0
        %474 = vmatprep.subr.bf16.mxu0 0
        %475 = vmatpush1.bf16.msra.mxu0 0
        %476 = vmatprep.subr.bf16.mxu0 0
        %477 = vmatpush1.bf16.msra.mxu0 0
        %478 = vmatprep.subr.bf16.mxu0 0
        %479 = vmatpush1.bf16.msra.mxu0 0
        %480 = vmatprep.mubr.bf16.mxu0 0
        %481 = vmatmul.mubr.bf16.gmra.mrb[0].mxu0 %v446
        %v482 = vpop.f32.mrb[0].mxu0
        %v483 = vadd.f32 %v425, %v482
        %v484 = vpop.f32.mrb[0].mxu0
        %v485 = vpop.f32.mrb[0].mxu0
        %v486 = vadd.f32 %v425, %v485
        %v487 = vpop.f32.mrb[0].mxu0
        %488 = vdwg.mxu0
        %v489 = vmul.f32 %v483, %v483
        %v490 = vmul.f32 %v486, %v486
        %v491 = vmul.f32 %v483, %v489
        %v492 = vmul.f32 %v486, %v490
        %v493 = vmul.f32 %v491, 0.044715
        %v494 = vmul.f32 %v492, 0.044715
        %v495 = vadd.f32 %v483, %v493
        %v496 = vadd.f32 %v486, %v494
        %v497 = vmul.f32 %v495, 0.7978846
        %v498 = vmul.f32 %v496, 0.7978846
        %v499 = vtanh.pop %v497
        %v500 = vtanh.pop %v498
        %v501 = vadd.f32 %v499, 1.0
        %v502 = vadd.f32 %v500, 1.0
        %v503 = vmul.f32 %v501, 0.5
        %v504 = vmul.f32 %v502, 0.5
        %v505 = vmul.f32 %v483, %v503
        %v506 = vmul.f32 %v486, %v504
        %s507 = scalar_lea.vmem %s3, %s30
        %v508 = vld [vmem:[%s507] sm:$0x1]
        %v510 = vlaneseq
        %v511 = vshrl.u32 %v510, 7
        %v512 = vsub.s32 0, %v511
        %v513 = vrot.slane %v508, %v512
        %v515 = vmul.f32 %v505, %v513
        %v516 = vmul.f32 %v506, %v513
        %v517 = vsel %vm444, %v515, 0.0
        %518 = vadd.xlane.f32.xlu0 %v517
        %v519 = vpop.xlane.xlu0 %518
        %v520 = vsel %vm444, %v516, 0.0
        %521 = vadd.xlane.f32.xlu0 %v520
        %v522 = vpop.xlane.xlu0 %521
        %v523 = vld [vmem:[#allocation2] sm:$0xf]
        %v524 = vld [vmem:[%s4] sm:$0xf]
        %v525 = vld [vmem:[%s5] sm:$0xff]
        %v526 = vld [vmem:[%s5 + $0x8] sm:$0xff]
        %v527 = vmul.f32 %v525, %v519
        %v528 = vmul.f32 %v526, %v522
        %vm529 = vcmask 130048
        %v531 = vsel %vm529, %v524, 0
        %533 = vmatprep.subr.mxu0 0.0
        %534 = vmatpush1.msra.mxu0 %v527
        %535 = vmatprep.subr.mxu0 0.0
        %536 = vmatpush1.msra.mxu0 %v528
        %537 = vmatprep.subr.mxu0 0.0
        %538 = vmatpush1.msra.mxu0 0.0
        %539 = vmatprep.subr.mxu0 0.0
        %540 = vmatpush1.msra.mxu0 0.0
        %541 = vmatprep.subr.mxu0 0.0
        %542 = vmatpush1.msra.mxu0 0.0
        %543 = vmatprep.subr.mxu0 0.0
        %544 = vmatpush1.msra.mxu0 0.0
        %545 = vmatprep.subr.mxu0 0.0
        %546 = vmatpush1.msra.mxu0 0.0
        %547 = vmatprep.subr.mxu0 0.0
        %548 = vmatpush1.msra.mxu0 0.0
        %549 = vmatprep.subr.mxu0 0.0
        %550 = vmatpush1.msra.mxu0 0.0
        %551 = vmatprep.subr.mxu0 0.0
        %552 = vmatpush1.msra.mxu0 0.0
        %553 = vmatprep.subr.mxu0 0.0
        %554 = vmatpush1.msra.mxu0 0.0
        %555 = vmatprep.subr.mxu0 0.0
        %556 = vmatpush1.msra.mxu0 0.0
        %557 = vmatprep.subr.mxu0 0.0
        %558 = vmatpush1.msra.mxu0 0.0
        %559 = vmatprep.subr.mxu0 0.0
        %560 = vmatpush1.msra.mxu0 0.0
        %561 = vmatprep.subr.mxu0 0.0
        %562 = vmatpush1.msra.mxu0 0.0
        %563 = vmatprep.subr.mxu0 0.0
        %564 = vmatpush1.msra.mxu0 0.0
        %565 = vmatprep.subr.mxu0 0.0
        %566 = vmatpush1.msra.mxu0 0.0
        %567 = vmatprep.subr.mxu0 0.0
        %568 = vmatpush1.msra.mxu0 0.0
        %569 = vmatprep.subr.mxu0 0.0
        %570 = vmatpush1.msra.mxu0 0.0
        %571 = vmatprep.subr.mxu0 0.0
        %572 = vmatpush1.msra.mxu0 0.0
        %573 = vmatprep.subr.mxu0 0.0
        %574 = vmatpush1.msra.mxu0 0.0
        %575 = vmatprep.subr.mxu0 0.0
        %576 = vmatpush1.msra.mxu0 0.0
        %577 = vmatprep.subr.mxu0 0.0
        %578 = vmatpush1.msra.mxu0 0.0
        %579 = vmatprep.subr.mxu0 0.0
        %580 = vmatpush1.msra.mxu0 0.0
        %581 = vmatprep.subr.mxu0 0.0
        %582 = vmatpush1.msra.mxu0 0.0
        %583 = vmatprep.subr.mxu0 0.0
        %584 = vmatpush1.msra.mxu0 0.0
        %585 = vmatprep.subr.mxu0 0.0
        %586 = vmatpush1.msra.mxu0 0.0
        %587 = vmatprep.subr.mxu0 0.0
        %588 = vmatpush1.msra.mxu0 0.0
        %589 = vmatprep.subr.mxu0 0.0
        %590 = vmatpush1.msra.mxu0 0.0
        %591 = vmatprep.subr.mxu0 0.0
        %592 = vmatpush1.msra.mxu0 0.0
        %593 = vmatprep.subr.mxu0 0.0
        %594 = vmatpush1.msra.mxu0 0.0
        %595 = vmatprep.subr.mxu0 0.0
        %596 = vmatpush1.msra.mxu0 0.0
        %597 = vmatprep.mubr.f32.mxu0 0.0
        %598 = vmatmul.mubr.f32.gmra.mrb[0].mxu0 %v531
        %v599 = vpop.f32.mrb[0].mxu0
        %v600 = vadd.f32 0.0, %v599
        %v601 = vpop.f32.mrb[0].mxu0
        %602 = vdwg.mxu0
        %v603 = vadd.f32 %v523, %v600
        %vm604 = vcmask 27648
        %605 = vst.msk [vmem:[#allocation2] sm:$0xf] %vm604, %v603
        %p606 = scmp.eq.s32.totalorder %s30, 1
        // Predicated region
        $region65: #{tpu_custom_call.1} parent=55 // pred_check
          %p607 = pneg %p606
        $region66: #{tpu_custom_call.1} parent=55 // pred_check_branch
          %609 = sbr.rel (%p607) target = $region68
        $region67: #{tpu_custom_call.1} parent=55 // pred_region
          %v610 = vld [vmem:[#allocation2] sm:$0xf]
          %v611 = vpack.c.bf16 %v610, %v610
          %v612 = vld [vmem:[%s7] sm:$0x3]
          %vm613 = vcmask 31744
          %v615 = vsel %vm613, %v611, 0
          %vm617 = vcmask 1041408
          %v619 = vsel %vm617, %v612, 0
          %621 = vmatprep.subr.bf16.mxu0 0
          %622 = vmatpush1.bf16.msra.mxu0 %v619
          %623 = vmatprep.subr.bf16.mxu0 0
          %624 = vmatpush1.bf16.msra.mxu0 0
          %625 = vmatprep.subr.bf16.mxu0 0
          %626 = vmatpush1.bf16.msra.mxu0 0
          %627 = vmatprep.subr.bf16.mxu0 0
          %628 = vmatpush1.bf16.msra.mxu0 0
          %629 = vmatprep.subr.bf16.mxu0 0
          %630 = vmatpush1.bf16.msra.mxu0 0
          %631 = vmatprep.subr.bf16.mxu0 0
          %632 = vmatpush1.bf16.msra.mxu0 0
          %633 = vmatprep.subr.bf16.mxu0 0
          %634 = vmatpush1.bf16.msra.mxu0 0
          %635 = vmatprep.subr.bf16.mxu0 0
          %636 = vmatpush1.bf16.msra.mxu0 0
          %637 = vmatprep.subr.bf16.mxu0 0
          %638 = vmatpush1.bf16.msra.mxu0 0
          %639 = vmatprep.subr.bf16.mxu0 0
          %640 = vmatpush1.bf16.msra.mxu0 0
          %641 = vmatprep.subr.bf16.mxu0 0
          %642 = vmatpush1.bf16.msra.mxu0 0
          %643 = vmatprep.subr.bf16.mxu0 0
          %644 = vmatpush1.bf16.msra.mxu0 0
          %645 = vmatprep.subr.bf16.mxu0 0
          %646 = vmatpush1.bf16.msra.mxu0 0
          %647 = vmatprep.subr.bf16.mxu0 0
          %648 = vmatpush1.bf16.msra.mxu0 0
          %649 = vmatprep.subr.bf16.mxu0 0
          %650 = vmatpush1.bf16.msra.mxu0 0
          %651 = vmatprep.subr.bf16.mxu0 0
          %652 = vmatpush1.bf16.msra.mxu0 0
          %653 = vmatprep.mubr.bf16.mxu0 0
          %654 = vmatmul.mubr.bf16.gmra.mrb[0].mxu0 %v615
          %v655 = vpop.f32.mrb[0].mxu0
          %v656 = vadd.f32 0.0, %v655
          %v657 = vpop.f32.mrb[0].mxu0
          %v658 = vpop.f32.mrb[0].mxu0
          %v659 = vpop.f32.mrb[0].mxu0
          %660 = vdwg.mxu0
          %v661 = vld [vmem:[%s6] sm:$0xf]
          %v662 = vld [vmem:[%s6 + $0x4] sm:$0xf]
          %v663 = vld [vmem:[%s6 + $0x8] sm:$0xf]
          %v664 = vld [vmem:[%s6 + $0xc] sm:$0xf]
          %v665 = vld [vmem:[%s6 + $0x10] sm:$0xf]
          %v666 = vld [vmem:[%s6 + $0x14] sm:$0xf]
          %v667 = vld [vmem:[%s6 + $0x18] sm:$0xf]
          %v668 = vpack.c.bf16 %v656, %v656
          %v676 = vunpack.c.l.b16 %v661
          %v677 = vunpack.c.l.b16 %v662
          %v678 = vunpack.c.l.b16 %v663
          %v679 = vunpack.c.l.b16 %v664
          %v680 = vunpack.c.l.b16 %v665
          %v681 = vunpack.c.l.b16 %v666
          %v682 = vunpack.c.l.b16 %v667
          %v683 = vpack.c.b16 %v677, %v676
          %v684 = vpack.c.b16 %v679, %v678
          %v685 = vpack.c.b16 %v681, %v680
          %v686 = vpack.c.b16 %v682, %v682
          %v688 = vsel %vm613, %v683, 0
          %v691 = vsel %vm613, %v684, 0
          %v694 = vsel %vm613, %v685, 0
          %v697 = vsel %vm613, %v686, 0
          %v700 = vsel %vm617, %v668, 0
          %702 = vmatprep.subr.bf16.mxu0 0
          %703 = vmatpush1.bf16.msra.mxu0 %v700
          %704 = vmatprep.subr.bf16.mxu0 0
          %705 = vmatpush1.bf16.msra.mxu0 0
          %706 = vmatprep.subr.bf16.mxu0 0
          %707 = vmatpush1.bf16.msra.mxu0 0
          %708 = vmatprep.subr.bf16.mxu0 0
          %709 = vmatpush1.bf16.msra.mxu0 0
          %710 = vmatprep.subr.bf16.mxu0 0
          %711 = vmatpush1.bf16.msra.mxu0 0
          %712 = vmatprep.subr.bf16.mxu0 0
          %713 = vmatpush1.bf16.msra.mxu0 0
          %714 = vmatprep.subr.bf16.mxu0 0
          %715 = vmatpush1.bf16.msra.mxu0 0
          %716 = vmatprep.subr.bf16.mxu0 0
          %717 = vmatpush1.bf16.msra.mxu0 0
          %718 = vmatprep.subr.bf16.mxu0 0
          %719 = vmatpush1.bf16.msra.mxu0 0
          %720 = vmatprep.subr.bf16.mxu0 0
          %721 = vmatpush1.bf16.msra.mxu0 0
          %722 = vmatprep.subr.bf16.mxu0 0
          %723 = vmatpush1.bf16.msra.mxu0 0
          %724 = vmatprep.subr.bf16.mxu0 0
          %725 = vmatpush1.bf16.msra.mxu0 0
          %726 = vmatprep.subr.bf16.mxu0 0
          %727 = vmatpush1.bf16.msra.mxu0 0
          %728 = vmatprep.subr.bf16.mxu0 0
          %729 = vmatpush1.bf16.msra.mxu0 0
          %730 = vmatprep.subr.bf16.mxu0 0
          %731 = vmatpush1.bf16.msra.mxu0 0
          %732 = vmatprep.subr.bf16.mxu0 0
          %733 = vmatpush1.bf16.msra.mxu0 0
          %734 = vmatprep.mubr.bf16.mxu0 0
          %735 = vmatmul.mubr.bf16.gmra.mrb[0].mxu0 %v688
          %v736 = vpop.f32.mrb[0].mxu0
          %v737 = vadd.f32 0.0, %v736
          %v738 = vpop.f32.mrb[0].mxu0
          %v739 = vpop.f32.mrb[0].mxu0
          %v740 = vadd.f32 0.0, %v739
          %v741 = vpop.f32.mrb[0].mxu0
          %742 = vmatprep.mubr.bf16.mxu0 0
          %743 = vmatmul.mubr.bf16.gmra.mrb[0].mxu0 %v691
          %v744 = vpop.f32.mrb[0].mxu0
          %v745 = vadd.f32 0.0, %v744
          %v746 = vpop.f32.mrb[0].mxu0
          %v747 = vpop.f32.mrb[0].mxu0
          %v748 = vadd.f32 0.0, %v747
          %v749 = vpop.f32.mrb[0].mxu0
          %750 = vmatprep.mubr.bf16.mxu0 0
          %751 = vmatmul.mubr.bf16.gmra.mrb[0].mxu0 %v694
          %v752 = vpop.f32.mrb[0].mxu0
          %v753 = vadd.f32 0.0, %v752
          %v754 = vpop.f32.mrb[0].mxu0
          %v755 = vpop.f32.mrb[0].mxu0
          %v756 = vadd.f32 0.0, %v755
          %v757 = vpop.f32.mrb[0].mxu0
          %758 = vmatprep.mubr.bf16.mxu0 0
          %759 = vmatmul.mubr.bf16.gmra.mrb[0].mxu0 %v697
          %v760 = vpop.f32.mrb[0].mxu0
          %v761 = vadd.f32 0.0, %v760
          %v762 = vpop.f32.mrb[0].mxu0
          %v763 = vpop.f32.mrb[0].mxu0
          %v764 = vpop.f32.mrb[0].mxu0
          %765 = vdwg.mxu0
          %v766 = vmax.f32 %v737, 0.0
          %v767 = vmax.f32 %v740, 0.0
          %v768 = vmax.f32 %v745, 0.0
          %v769 = vmax.f32 %v748, 0.0
          %v770 = vmax.f32 %v753, 0.0
          %v771 = vmax.f32 %v756, 0.0
          %v772 = vmax.f32 %v761, 0.0
          %773 = vst [vmem:[%s384] sm:$0xff] %v766
          %774 = vst [vmem:[%s384 + $0x8] sm:$0xff] %v767
          %775 = vst [vmem:[%s384 + $0x10] sm:$0xff] %v768
          %776 = vst [vmem:[%s384 + $0x18] sm:$0xff] %v769
          %777 = vst [vmem:[%s384 + $0x20] sm:$0xff] %v770
          %778 = vst [vmem:[%s384 + $0x28] sm:$0xff] %v771
          %779 = vst [vmem:[%s384 + $0x30] sm:$0xff] %v772
        $region68: #{tpu_custom_call.1} parent=55 // pred_fallthru
          _
        %s780 = sand.u32 %s248, 1
        %s781 = scalar_lea.sflag [#allocation6], %s780
        %s782 = sand.u32 %s248, 1
        %s783 = smul.addr %s782, 56
        %s784 = scalar_lea.vmem [#allocation7], %s783
        // Predicated region
        $region69: #{tpu_custom_call.1} parent=55 // pred_check
          %p785 = pneg %p258
        $region70: #{tpu_custom_call.1} parent=55 // pred_check_branch
          %787 = sbr.rel (%p785) target = $region72
        $region71: #{tpu_custom_call.1} parent=55 // pred_region
          %s789 = ssub.s32 896, 896
          %790 = vsyncadd %s781, %s789
          %s791 = smul.addr %s29, 7
          %s792 = smul.addr %s791, 128
          %s793 = scalar_lea.hbm %s9, %s792
          %s794 = sshll.u32 %s784, 4
          %s795 = int_to_ptr.vmem [resolvable:$true] %s794
          %800 = dma.vmem_to_hbm [thread:$0]  %s795, 896, %s793, %s781, 128, 128, 8
        $region72: #{tpu_custom_call.1} parent=55 // pred_fallthru
          _
      $region56: #{tpu_custom_call.1} parent=5 // pred_fallthru
        _
      %p801 = scmp.le.s32.totalorder 2, %s20
      // Predicated region
      $region73: #{tpu_custom_call.1} parent=5 // pred_check
        %p802 = pneg %p801
      $region74: #{tpu_custom_call.1} parent=5 // pred_check_branch
        %804 = sbr.rel (%p802) target = $region76
      $region75: #{tpu_custom_call.1} parent=5 // pred_region
        %s805 = ssub.s32 %s20, 2
        // Predicated region
        $region77: #{tpu_custom_call.1} parent=75 // pred_check
          %p806 = pneg %p264
        $region78: #{tpu_custom_call.1} parent=75 // pred_check_branch
          %808 = sbr.rel (%p806) target = $region80
        $region79: #{tpu_custom_call.1} parent=75 // pred_region
          %s809 = sand.u32 %s249, 1
          %s810 = scalar_lea.sflag [#allocation6], %s809
          %s811 = sand.u32 %s249, 1
          %s812 = smul.addr %s811, 56
          %s813 = scalar_lea.vmem [#allocation7], %s812
          %814 = dma.done %s810, 896
        $region80: #{tpu_custom_call.1} parent=75 // pred_fallthru
          _
      $region76: #{tpu_custom_call.1} parent=5 // pred_fallthru
        _
    $region6: #{tpu_custom_call.1} parent=1 // loop_footer
      %s24 = sadd.s32 1, %s20
    $region7: #{tpu_custom_call.1} parent=1 // loop_footer_branch
      %19 = sbr.rel target = $region3
    $region8: #{tpu_custom_call.1} parent=1 // loop_exit
      _
    %815 = vsyncpa [#allocation5], 1
    %s816 = scalar_lea.sflag [#allocation5], 1
    %817 = vsyncpa %s816, 1
    %818 = vsyncpa [#allocation6], 1
    %s819 = scalar_lea.sflag [#allocation6], 1
    %820 = vsyncpa %s819, 1

</llo_original>
